<compile_context>
chip_gen: v7x
topology: tpu7x:2x2x1
jax: 0.10.0
libtpu: 0.0.40
codegen_flags: <defaults>
</compile_context>

<pallas_src>
import jax
import jax.numpy as jnp
import numpy as np
from jax.experimental import pallas as pl
from jax.experimental.pallas import tpu as pltpu

EPS = 1e-06
GAMMA = 2.0          # gamma == 2 is hardcoded in the kernel as an explicit square
IGNORE_INDEX = 255.0
W_DICE = 1.0
W_FOCAL = 8.0

LANES = 128
TR_MAX = 4096        # rows per grid step (block = (tr, 128)); multiple of 8
NUM_SUMS = 5         # [intersection, sum(sigmoid), sum(targets), focal_sum, focal_count]


def _round_up(x, m):
    return ((x + m - 1) // m) * m


def _focal_term(sig, tgt):
    """Per-element focal term with gamma == 2 (explicit square, no pow)."""
    oo = jnp.clip(sig, EPS, 1.0 - EPS)
    tt = jnp.clip(tgt, EPS, 1.0 - EPS)
    pt = (1.0 - tt) * (1.0 - oo) + tt * oo
    x = 1.0 - pt
    return -(x * x) * jnp.log(pt)


def combo_loss_dice(outputs, targets):
    """outputs: logits (any shape/dtype); targets: same shape (0/1 or 255=ignore). Scalar f32."""
    o_flat = jnp.ravel(outputs)
    t_flat = jnp.ravel(targets)
    n = o_flat.shape[0]

    rows = n // LANES            # complete 128-lane rows handled by the kernel
    n_main = rows * LANES        # <128-element tail handled in plain JAX below

    if rows > 0:
        o2 = o_flat[:n_main].reshape(rows, LANES)
        t2 = t_flat[:n_main].reshape(rows, LANES)

        tr = min(TR_MAX, _round_up(rows, 8))   # block rows (multiple of 8)
        num_tiles = pl.cdiv(rows, tr)
        ragged = (rows % tr) != 0              # only the last tile needs the row mask

        def kernel(o_ref, t_ref, inter_o, so_o, st_o, fs_o, fc_o,
                   inter_a, so_a, st_a, fs_a, fc_a):
            i = pl.program_id(0)

            @pl.when(i == 0)
            def _init():
                inter_a[...] = jnp.zeros_like(inter_a)
                so_a[...] = jnp.zeros_like(so_a)
                st_a[...] = jnp.zeros_like(st_a)
                fs_a[...] = jnp.zeros_like(fs_a)
                fc_a[...] = jnp.zeros_like(fc_a)

            o = o_ref[...].astype(jnp.float32)   # upcast in-register (bf16/u8 inputs fine)
            t = t_ref[...].astype(jnp.float32)
            s = jax.nn.sigmoid(o)

            def tile_sum(x):
                # (tr, 128) -> (8, 128): tile-aligned reshape + VALU add tree, no XLU.
                return jnp.sum(x.reshape(tr // 8, 8, LANES), axis=0)

            def accumulate(sm, tm, keep):
                # soft-dice partial sums (dice includes ignore_index pixels, as in torch)
                inter_a[...] += tile_sum(sm * tm)
                so_a[...] += tile_sum(sm)
                st_a[...] += tile_sum(tm)
                # focal partial sums (only non-ignored, in-bounds pixels)
                term = _focal_term(sm, tm)
                fs_a[...] += tile_sum(jnp.where(keep, term, 0.0))
                fc_a[...] += tile_sum(jnp.where(keep, 1.0, 0.0))

            if ragged:
                @pl.when(i < num_tiles - 1)
                def _fast():
                    accumulate(s, t, t != IGNORE_INDEX)

                @pl.when(i == num_tiles - 1)
                def _masked():
                    # row-granular mask (no 32-bit element-index overflow risk)
                    row = jax.lax.broadcasted_iota(jnp.int32, (tr, LANES), 0)
                    valid = (row + i * tr) < rows
                    sm = jnp.where(valid, s, 0.0)
                    tm = jnp.where(valid, t, 0.0)
                    keep = jnp.logical_and(valid, t != IGNORE_INDEX)
                    accumulate(sm, tm, keep)
            else:
                accumulate(s, t, t != IGNORE_INDEX)

            @pl.when(i == pl.num_programs(0) - 1)
            def _finalize():
                inter_o[...] = inter_a[...]
                so_o[...] = so_a[...]
                st_o[...] = st_a[...]
                fs_o[...] = fs_a[...]
                fc_o[...] = fc_a[...]

        in_blk = pl.BlockSpec((tr, LANES), lambda i: (i, 0))
        out_blks = [pl.BlockSpec((8, LANES), lambda i: (0, 0)) for _ in range(NUM_SUMS)]

        partials = pl.pallas_call(
            kernel,
            out_shape=tuple(jax.ShapeDtypeStruct((8, LANES), jnp.float32)
                            for _ in range(NUM_SUMS)),
            grid_spec=pltpu.PrefetchScalarGridSpec(
                num_scalar_prefetch=0,
                grid=(num_tiles,),
                in_specs=[in_blk, in_blk],
                out_specs=out_blks,
                scratch_shapes=[pltpu.VMEM((8, LANES), jnp.float32)
                                for _ in range(NUM_SUMS)],
            ),
            compiler_params=pltpu.CompilerParams(
                dimension_semantics=("arbitrary",),
                vmem_limit_bytes=32 * 1024 * 1024,
            ),
        )(o2, t2)

        inter, sum_o, sum_t, f_sum, f_cnt = (jnp.sum(p) for p in partials)
    else:
        inter = sum_o = sum_t = f_sum = f_cnt = jnp.float32(0.0)

    # <=127-element tail (n % 128) folded in with trivial plain-JAX ops
    # (avoids materializing padded copies of the full tensors).
    if n_main < n:
        ot = o_flat[n_main:].astype(jnp.float32)
        tt = t_flat[n_main:].astype(jnp.float32)
        st = jax.nn.sigmoid(ot)
        inter = inter + jnp.sum(st * tt)
        sum_o = sum_o + jnp.sum(st)
        sum_t = sum_t + jnp.sum(tt)
        keep = tt != IGNORE_INDEX
        term = _focal_term(st, tt)
        f_sum = f_sum + jnp.sum(jnp.where(keep, term, 0.0))
        f_cnt = f_cnt + jnp.sum(keep.astype(jnp.float32))

    dice_loss = 1.0 - (2.0 * inter + EPS) / (sum_o + sum_t + EPS)
    # NOTE: if every pixel is ignore_index, f_cnt == 0 -> NaN, matching torch .mean()
    # of an empty tensor.
    focal_loss = f_sum / f_cnt
    return W_DICE * dice_loss + W_FOCAL * focal_loss


def _reference(outputs, targets):
    """Pure-JAX reference mirroring the PyTorch ComboLossDice module."""
    s = jax.nn.sigmoid(outputs.astype(jnp.float32)).reshape(-1)
    t = targets.astype(jnp.float32).reshape(-1)
    inter = jnp.sum(s * t)
    union = jnp.sum(s) + jnp.sum(t) + EPS
    dice = 1.0 - (2.0 * inter + EPS) / union
    mask = t != IGNORE_INDEX
    oo = jnp.clip(s, EPS, 1.0 - EPS)
    tt = jnp.clip(t, EPS, 1.0 - EPS)
    pt = (1.0 - tt) * (1.0 - oo) + tt * oo
    term = -((1.0 - pt) ** GAMMA) * jnp.log(pt)
    focal = jnp.sum(jnp.where(mask, term, 0.0)) / jnp.sum(mask.astype(jnp.float32))
    return W_DICE * dice + W_FOCAL * focal


if __name__ == "__main__":
    # Segmentation-style NCHW logits + binary targets with some ignore_index pixels.
    key = jax.random.PRNGKey(0)
    k1, k2, k3 = jax.random.split(key, 3)
    outputs = jax.random.normal(k1, (2, 4, 16, 16), dtype=jnp.float32)
    tgt_bin = (jax.random.uniform(k2, (2, 4, 16, 16)) > 0.5).astype(jnp.float32)
    ignore = jax.random.uniform(k3, (2, 4, 16, 16)) > 0.9
    targets = jnp.where(ignore, jnp.float32(IGNORE_INDEX), tgt_bin)

    loss = jax.block_until_ready(combo_loss_dice(outputs, targets))
    ref = jax.block_until_ready(_reference(outputs, targets))
    np.testing.assert_allclose(np.asarray(loss), np.asarray(ref), rtol=1e-4, atol=1e-4)

    # Unaligned-size check: exercises the in-kernel ragged-row mask path and the JAX tail.
    k4, k5, k6 = jax.random.split(jax.random.PRNGKey(1), 3)
    shp = (2, 3, 15, 17)
    o_u = jax.random.normal(k4, shp, dtype=jnp.float32)
    tb_u = (jax.random.uniform(k5, shp) > 0.5).astype(jnp.float32)
    ig_u = jax.random.uniform(k6, shp) > 0.9
    t_u = jnp.where(ig_u, jnp.float32(IGNORE_INDEX), tb_u)
    loss_u = jax.block_until_ready(combo_loss_dice(o_u, t_u))
    ref_u = jax.block_until_ready(_reference(o_u, t_u))
    np.testing.assert_allclose(np.asarray(loss_u), np.asarray(ref_u), rtol=1e-4, atol=1e-4)

    print("KERNEL_OK")
</pallas_src>

<mosaic_0001>
module attributes {stable_mosaic.version = 11 : i64} {
  func.func @kernel(%arg0: i32, %arg1: memref<16x128xf32, #tpu.memory_space<vmem>>, %arg2: memref<16x128xf32, #tpu.memory_space<vmem>>, %arg3: memref<8x128xf32, #tpu.memory_space<vmem>>, %arg4: memref<8x128xf32, #tpu.memory_space<vmem>>, %arg5: memref<8x128xf32, #tpu.memory_space<vmem>>, %arg6: memref<8x128xf32, #tpu.memory_space<vmem>>, %arg7: memref<8x128xf32, #tpu.memory_space<vmem>>, %arg8: memref<8x128xf32, #tpu.memory_space<vmem>>, %arg9: memref<8x128xf32, #tpu.memory_space<vmem>>, %arg10: memref<8x128xf32, #tpu.memory_space<vmem>>, %arg11: memref<8x128xf32, #tpu.memory_space<vmem>>, %arg12: memref<8x128xf32, #tpu.memory_space<vmem>>) attributes {dimension_semantics = [#tpu.dimension_semantics<arbitrary>], iteration_bounds = array<i64: 1>, scalar_prefetch = 0 : i64, scratch_operands = 5 : i64, tpu.core_type = #tpu.core_type<tc>, window_params = [{transform_indices = @transform_0, window_bounds = array<i64: 16, 128>}, {transform_indices = @transform_1, window_bounds = array<i64: 16, 128>}, {pipeline_mode = #tpu.pipeline_mode<synchronous>, transform_indices = @transform_2, window_bounds = array<i64: 8, 128>}, {pipeline_mode = #tpu.pipeline_mode<synchronous>, transform_indices = @transform_3, window_bounds = array<i64: 8, 128>}, {pipeline_mode = #tpu.pipeline_mode<synchronous>, transform_indices = @transform_4, window_bounds = array<i64: 8, 128>}, {pipeline_mode = #tpu.pipeline_mode<synchronous>, transform_indices = @transform_5, window_bounds = array<i64: 8, 128>}, {pipeline_mode = #tpu.pipeline_mode<synchronous>, transform_indices = @transform_6, window_bounds = array<i64: 8, 128>}]} {
    %c0_i32 = arith.constant 0 : i32
    %0 = arith.cmpi eq, %arg0, %c0_i32 : i32
    %1 = arith.extui %0 : i1 to i32
    %c0_i32_0 = arith.constant 0 : i32
    %2 = arith.cmpi ne, %1, %c0_i32_0 : i32
    scf.if %2 {
      %cst_43 = arith.constant 0.000000e+00 : f32
      %68 = vector.broadcast %cst_43 : f32 to vector<8x128xf32>
      %c0_44 = arith.constant 0 : index
      %c0_45 = arith.constant 0 : index
      %69 = vector.load %arg8[%c0_44, %c0_45] : memref<8x128xf32, #tpu.memory_space<vmem>>, vector<8x128xf32>
      tpu.vector_store %arg8[%c0_44, %c0_45], %68 {strides = array<i32>} : memref<8x128xf32, #tpu.memory_space<vmem>>, vector<8x128xf32>,
      %cst_46 = arith.constant 0.000000e+00 : f32
      %70 = vector.broadcast %cst_46 : f32 to vector<8x128xf32>
      %c0_47 = arith.constant 0 : index
      %c0_48 = arith.constant 0 : index
      %71 = vector.load %arg9[%c0_47, %c0_48] : memref<8x128xf32, #tpu.memory_space<vmem>>, vector<8x128xf32>
      tpu.vector_store %arg9[%c0_47, %c0_48], %70 {strides = array<i32>} : memref<8x128xf32, #tpu.memory_space<vmem>>, vector<8x128xf32>,
      %cst_49 = arith.constant 0.000000e+00 : f32
      %72 = vector.broadcast %cst_49 : f32 to vector<8x128xf32>
      %c0_50 = arith.constant 0 : index
      %c0_51 = arith.constant 0 : index
      %73 = vector.load %arg10[%c0_50, %c0_51] : memref<8x128xf32, #tpu.memory_space<vmem>>, vector<8x128xf32>
      tpu.vector_store %arg10[%c0_50, %c0_51], %72 {strides = array<i32>} : memref<8x128xf32, #tpu.memory_space<vmem>>, vector<8x128xf32>,
      %cst_52 = arith.constant 0.000000e+00 : f32
      %74 = vector.broadcast %cst_52 : f32 to vector<8x128xf32>
      %c0_53 = arith.constant 0 : index
      %c0_54 = arith.constant 0 : index
      %75 = vector.load %arg11[%c0_53, %c0_54] : memref<8x128xf32, #tpu.memory_space<vmem>>, vector<8x128xf32>
      tpu.vector_store %arg11[%c0_53, %c0_54], %74 {strides = array<i32>} : memref<8x128xf32, #tpu.memory_space<vmem>>, vector<8x128xf32>,
      %cst_55 = arith.constant 0.000000e+00 : f32
      %76 = vector.broadcast %cst_55 : f32 to vector<8x128xf32>
      %c0_56 = arith.constant 0 : index
      %c0_57 = arith.constant 0 : index
      %77 = vector.load %arg12[%c0_56, %c0_57] : memref<8x128xf32, #tpu.memory_space<vmem>>, vector<8x128xf32>
      tpu.vector_store %arg12[%c0_56, %c0_57], %76 {strides = array<i32>} : memref<8x128xf32, #tpu.memory_space<vmem>>, vector<8x128xf32>,
    } else {
    }
    %c0 = arith.constant 0 : index
    %c0_1 = arith.constant 0 : index
    %3 = vector.load %arg1[%c0, %c0_1] : memref<16x128xf32, #tpu.memory_space<vmem>>, vector<16x128xf32>
    %c0_2 = arith.constant 0 : index
    %c0_3 = arith.constant 0 : index
    %4 = vector.load %arg2[%c0_2, %c0_3] : memref<16x128xf32, #tpu.memory_space<vmem>>, vector<16x128xf32>
    %5 = arith.negf %3 : vector<16x128xf32>
    %6 = math.exp %5 : vector<16x128xf32>
    %cst = arith.constant 1.000000e+00 : f32
    %7 = vector.broadcast %cst : f32 to vector<16x128xf32>
    %8 = arith.addf %7, %6 : vector<16x128xf32>
    %9 = arith.divf %7, %8 : vector<16x128xf32>
    %cst_4 = arith.constant 2.550000e+02 : f32
    %10 = vector.broadcast %cst_4 : f32 to vector<16x128xf32>
    %11 = arith.cmpf one, %4, %10 : vector<16x128xf32>
    %c0_5 = arith.constant 0 : index
    %c0_6 = arith.constant 0 : index
    %12 = vector.load %arg8[%c0_5, %c0_6] : memref<8x128xf32, #tpu.memory_space<vmem>>, vector<8x128xf32>
    %13 = arith.mulf %9, %4 : vector<16x128xf32>
    %14 = vector.shape_cast %13 : vector<16x128xf32> to vector<2x8x128xf32>
    %cst_7 = arith.constant dense<0.000000e+00> : vector<8x128xf32>
    %15 = vector.multi_reduction <add>, %14, %cst_7 [0] : vector<2x8x128xf32> to vector<8x128xf32>
    %16 = arith.addf %12, %15 : vector<8x128xf32>
    %c0_8 = arith.constant 0 : index
    %c0_9 = arith.constant 0 : index
    %17 = vector.load %arg8[%c0_8, %c0_9] : memref<8x128xf32, #tpu.memory_space<vmem>>, vector<8x128xf32>
    tpu.vector_store %arg8[%c0_8, %c0_9], %16 {strides = array<i32>} : memref<8x128xf32, #tpu.memory_space<vmem>>, vector<8x128xf32>,
    %c0_10 = arith.constant 0 : index
    %c0_11 = arith.constant 0 : index
    %18 = vector.load %arg9[%c0_10, %c0_11] : memref<8x128xf32, #tpu.memory_space<vmem>>, vector<8x128xf32>
    %19 = vector.shape_cast %9 : vector<16x128xf32> to vector<2x8x128xf32>
    %cst_12 = arith.constant dense<0.000000e+00> : vector<8x128xf32>
    %20 = vector.multi_reduction <add>, %19, %cst_12 [0] : vector<2x8x128xf32> to vector<8x128xf32>
    %21 = arith.addf %18, %20 : vector<8x128xf32>
    %c0_13 = arith.constant 0 : index
    %c0_14 = arith.constant 0 : index
    %22 = vector.load %arg9[%c0_13, %c0_14] : memref<8x128xf32, #tpu.memory_space<vmem>>, vector<8x128xf32>
    tpu.vector_store %arg9[%c0_13, %c0_14], %21 {strides = array<i32>} : memref<8x128xf32, #tpu.memory_space<vmem>>, vector<8x128xf32>,
    %c0_15 = arith.constant 0 : index
    %c0_16 = arith.constant 0 : index
    %23 = vector.load %arg10[%c0_15, %c0_16] : memref<8x128xf32, #tpu.memory_space<vmem>>, vector<8x128xf32>
    %24 = vector.shape_cast %4 : vector<16x128xf32> to vector<2x8x128xf32>
    %cst_17 = arith.constant dense<0.000000e+00> : vector<8x128xf32>
    %25 = vector.multi_reduction <add>, %24, %cst_17 [0] : vector<2x8x128xf32> to vector<8x128xf32>
    %26 = arith.addf %23, %25 : vector<8x128xf32>
    %c0_18 = arith.constant 0 : index
    %c0_19 = arith.constant 0 : index
    %27 = vector.load %arg10[%c0_18, %c0_19] : memref<8x128xf32, #tpu.memory_space<vmem>>, vector<8x128xf32>
    tpu.vector_store %arg10[%c0_18, %c0_19], %26 {strides = array<i32>} : memref<8x128xf32, #tpu.memory_space<vmem>>, vector<8x128xf32>,
    %cst_20 = arith.constant 9.99999997E-7 : f32
    %cst_21 = arith.constant 0.999998986 : f32
    %28 = vector.broadcast %cst_20 : f32 to vector<16x128xf32>
    %29 = arith.maximumf %28, %9 : vector<16x128xf32>
    %30 = vector.broadcast %cst_21 : f32 to vector<16x128xf32>
    %31 = arith.minimumf %30, %29 : vector<16x128xf32>
    %cst_22 = arith.constant 9.99999997E-7 : f32
    %cst_23 = arith.constant 0.999998986 : f32
    %32 = vector.broadcast %cst_22 : f32 to vector<16x128xf32>
    %33 = arith.maximumf %32, %4 : vector<16x128xf32>
    %34 = vector.broadcast %cst_23 : f32 to vector<16x128xf32>
    %35 = arith.minimumf %34, %33 : vector<16x128xf32>
    %cst_24 = arith.constant 1.000000e+00 : f32
    %36 = vector.broadcast %cst_24 : f32 to vector<16x128xf32>
    %37 = arith.subf %36, %35 : vector<16x128xf32>
    %cst_25 = arith.constant 1.000000e+00 : f32
    %38 = vector.broadcast %cst_25 : f32 to vector<16x128xf32>
    %39 = arith.subf %38, %31 : vector<16x128xf32>
    %40 = arith.mulf %37, %39 : vector<16x128xf32>
    %41 = arith.mulf %35, %31 : vector<16x128xf32>
    %42 = arith.addf %40, %41 : vector<16x128xf32>
    %cst_26 = arith.constant 1.000000e+00 : f32
    %43 = vector.broadcast %cst_26 : f32 to vector<16x128xf32>
    %44 = arith.subf %43, %42 : vector<16x128xf32>
    %45 = arith.mulf %44, %44 : vector<16x128xf32>
    %cst_27 = arith.constant 0.000000e+00 : f32
    %46 = vector.broadcast %cst_27 : f32 to vector<16x128xf32>
    %47 = arith.subf %46, %45 : vector<16x128xf32>
    %48 = math.log %42 : vector<16x128xf32>
    %49 = arith.mulf %47, %48 : vector<16x128xf32>
    %c0_28 = arith.constant 0 : index
    %c0_29 = arith.constant 0 : index
    %50 = vector.load %arg11[%c0_28, %c0_29] : memref<8x128xf32, #tpu.memory_space<vmem>>, vector<8x128xf32>
    %cst_30 = arith.constant 0.000000e+00 : f32
    %51 = vector.broadcast %cst_30 : f32 to vector<16x128xf32>
    %52 = arith.select %11, %49, %51 : vector<16x128xi1>, vector<16x128xf32>
    %53 = vector.shape_cast %52 : vector<16x128xf32> to vector<2x8x128xf32>
    %cst_31 = arith.constant dense<0.000000e+00> : vector<8x128xf32>
    %54 = vector.multi_reduction <add>, %53, %cst_31 [0] : vector<2x8x128xf32> to vector<8x128xf32>
    %55 = arith.addf %50, %54 : vector<8x128xf32>
    %c0_32 = arith.constant 0 : index
    %c0_33 = arith.constant 0 : index
    %56 = vector.load %arg11[%c0_32, %c0_33] : memref<8x128xf32, #tpu.memory_space<vmem>>, vector<8x128xf32>
    tpu.vector_store %arg11[%c0_32, %c0_33], %55 {strides = array<i32>} : memref<8x128xf32, #tpu.memory_space<vmem>>, vector<8x128xf32>,
    %c0_34 = arith.constant 0 : index
    %c0_35 = arith.constant 0 : index
    %57 = vector.load %arg12[%c0_34, %c0_35] : memref<8x128xf32, #tpu.memory_space<vmem>>, vector<8x128xf32>
    %cst_36 = arith.constant 1.000000e+00 : f32
    %cst_37 = arith.constant 0.000000e+00 : f32
    %58 = vector.broadcast %cst_36 : f32 to vector<16x128xf32>
    %59 = vector.broadcast %cst_37 : f32 to vector<16x128xf32>
    %60 = arith.select %11, %58, %59 : vector<16x128xi1>, vector<16x128xf32>
    %61 = vector.shape_cast %60 : vector<16x128xf32> to vector<2x8x128xf32>
    %cst_38 = arith.constant dense<0.000000e+00> : vector<8x128xf32>
    %62 = vector.multi_reduction <add>, %61, %cst_38 [0] : vector<2x8x128xf32> to vector<8x128xf32>
    %63 = arith.addf %57, %62 : vector<8x128xf32>
    %c0_39 = arith.constant 0 : index
    %c0_40 = arith.constant 0 : index
    %64 = vector.load %arg12[%c0_39, %c0_40] : memref<8x128xf32, #tpu.memory_space<vmem>>, vector<8x128xf32>
    tpu.vector_store %arg12[%c0_39, %c0_40], %63 {strides = array<i32>} : memref<8x128xf32, #tpu.memory_space<vmem>>, vector<8x128xf32>,
    %c0_i32_41 = arith.constant 0 : i32
    %65 = arith.cmpi eq, %arg0, %c0_i32_41 : i32
    %66 = arith.extui %65 : i1 to i32
    %c0_i32_42 = arith.constant 0 : i32
    %67 = arith.cmpi ne, %66, %c0_i32_42 : i32
    scf.if %67 {
      %c0_43 = arith.constant 0 : index
      %c0_44 = arith.constant 0 : index
      %68 = vector.load %arg8[%c0_43, %c0_44] : memref<8x128xf32, #tpu.memory_space<vmem>>, vector<8x128xf32>
      %c0_45 = arith.constant 0 : index
      %c0_46 = arith.constant 0 : index
      %69 = vector.load %arg3[%c0_45, %c0_46] : memref<8x128xf32, #tpu.memory_space<vmem>>, vector<8x128xf32>
      tpu.vector_store %arg3[%c0_45, %c0_46], %68 {strides = array<i32>} : memref<8x128xf32, #tpu.memory_space<vmem>>, vector<8x128xf32>,
      %c0_47 = arith.constant 0 : index
      %c0_48 = arith.constant 0 : index
      %70 = vector.load %arg9[%c0_47, %c0_48] : memref<8x128xf32, #tpu.memory_space<vmem>>, vector<8x128xf32>
      %c0_49 = arith.constant 0 : index
      %c0_50 = arith.constant 0 : index
      %71 = vector.load %arg4[%c0_49, %c0_50] : memref<8x128xf32, #tpu.memory_space<vmem>>, vector<8x128xf32>
      tpu.vector_store %arg4[%c0_49, %c0_50], %70 {strides = array<i32>} : memref<8x128xf32, #tpu.memory_space<vmem>>, vector<8x128xf32>,
      %c0_51 = arith.constant 0 : index
      %c0_52 = arith.constant 0 : index
      %72 = vector.load %arg10[%c0_51, %c0_52] : memref<8x128xf32, #tpu.memory_space<vmem>>, vector<8x128xf32>
      %c0_53 = arith.constant 0 : index
      %c0_54 = arith.constant 0 : index
      %73 = vector.load %arg5[%c0_53, %c0_54] : memref<8x128xf32, #tpu.memory_space<vmem>>, vector<8x128xf32>
      tpu.vector_store %arg5[%c0_53, %c0_54], %72 {strides = array<i32>} : memref<8x128xf32, #tpu.memory_space<vmem>>, vector<8x128xf32>,
      %c0_55 = arith.constant 0 : index
      %c0_56 = arith.constant 0 : index
      %74 = vector.load %arg11[%c0_55, %c0_56] : memref<8x128xf32, #tpu.memory_space<vmem>>, vector<8x128xf32>
      %c0_57 = arith.constant 0 : index
      %c0_58 = arith.constant 0 : index
      %75 = vector.load %arg6[%c0_57, %c0_58] : memref<8x128xf32, #tpu.memory_space<vmem>>, vector<8x128xf32>
      tpu.vector_store %arg6[%c0_57, %c0_58], %74 {strides = array<i32>} : memref<8x128xf32, #tpu.memory_space<vmem>>, vector<8x128xf32>,
      %c0_59 = arith.constant 0 : index
      %c0_60 = arith.constant 0 : index
      %76 = vector.load %arg12[%c0_59, %c0_60] : memref<8x128xf32, #tpu.memory_space<vmem>>, vector<8x128xf32>
      %c0_61 = arith.constant 0 : index
      %c0_62 = arith.constant 0 : index
      %77 = vector.load %arg7[%c0_61, %c0_62] : memref<8x128xf32, #tpu.memory_space<vmem>>, vector<8x128xf32>
      tpu.vector_store %arg7[%c0_61, %c0_62], %76 {strides = array<i32>} : memref<8x128xf32, #tpu.memory_space<vmem>>, vector<8x128xf32>,
    } else {
    }
    return
  }
  func.func @transform_0(%arg0: i32) -> (i32, i32) {
    %c0_i32 = arith.constant 0 : i32
    %c0_i32_0 = arith.constant 0 : i32
    return %arg0, %c0_i32 : i32, i32
  }
  func.func @transform_1(%arg0: i32) -> (i32, i32) {
    %c0_i32 = arith.constant 0 : i32
    %c0_i32_0 = arith.constant 0 : i32
    return %arg0, %c0_i32 : i32, i32
  }
  func.func @transform_2(%arg0: i32) -> (i32, i32) {
    %c0_i32 = arith.constant 0 : i32
    %c0_i32_0 = arith.constant 0 : i32
    %c0_i32_1 = arith.constant 0 : i32
    return %c0_i32, %c0_i32_0 : i32, i32
  }
  func.func @transform_3(%arg0: i32) -> (i32, i32) {
    %c0_i32 = arith.constant 0 : i32
    %c0_i32_0 = arith.constant 0 : i32
    %c0_i32_1 = arith.constant 0 : i32
    return %c0_i32, %c0_i32_0 : i32, i32
  }
  func.func @transform_4(%arg0: i32) -> (i32, i32) {
    %c0_i32 = arith.constant 0 : i32
    %c0_i32_0 = arith.constant 0 : i32
    %c0_i32_1 = arith.constant 0 : i32
    return %c0_i32, %c0_i32_0 : i32, i32
  }
  func.func @transform_5(%arg0: i32) -> (i32, i32) {
    %c0_i32 = arith.constant 0 : i32
    %c0_i32_0 = arith.constant 0 : i32
    %c0_i32_1 = arith.constant 0 : i32
    return %c0_i32, %c0_i32_0 : i32, i32
  }
  func.func @transform_6(%arg0: i32) -> (i32, i32) {
    %c0_i32 = arith.constant 0 : i32
    %c0_i32_0 = arith.constant 0 : i32
    %c0_i32_1 = arith.constant 0 : i32
    return %c0_i32, %c0_i32_0 : i32, i32
  }
}

</mosaic_0001>

<llo_original>
// kernel: tpu_custom_call.1
$region0: #{tpu_custom_call.1}
  #allocation0 [shape = 'u32[]', space=smem, size = 0x4, offset = 0x4, fixed_abs, tag = 'smem constant byte address 0x4 - core index']
  #allocation1 [shape = 'u32[144,128]{1,0:T(1,128)}', space=vmem, size = 0x12000, scoped, tag = 'internal scratch']
  #allocation2 [shape = 'f32[8,128]{1,0:T(8,128)}', space=vmem, size = 0x1000, scoped, tag = 'scratch operand']
  #allocation3 [shape = 'f32[8,128]{1,0:T(8,128)}', space=vmem, size = 0x1000, scoped, tag = 'scratch operand']
  #allocation4 [shape = 'f32[8,128]{1,0:T(8,128)}', space=vmem, size = 0x1000, scoped, tag = 'scratch operand']
  #allocation5 [shape = 'f32[8,128]{1,0:T(8,128)}', space=vmem, size = 0x1000, scoped, tag = 'scratch operand']
  #allocation6 [shape = 'f32[8,128]{1,0:T(8,128)}', space=vmem, size = 0x1000, scoped, tag = 'scratch operand']
  %s0 = inlined_call_operand.hbm [shape: f32[16,128], index: 0, kind: input, shape index: {}]
  %s1 = inlined_call_operand.hbm [shape: f32[16,128], index: 1, kind: input, shape index: {}]
  %s2 = inlined_call_operand.hbm [shape: f32[8,128], index: 2, kind: output, shape index: {0}]
  %s3 = inlined_call_operand.hbm [shape: f32[8,128], index: 3, kind: output, shape index: {1}]
  %s4 = inlined_call_operand.hbm [shape: f32[8,128], index: 4, kind: output, shape index: {2}]
  %s5 = inlined_call_operand.hbm [shape: f32[8,128], index: 5, kind: output, shape index: {3}]
  %s6 = inlined_call_operand.hbm [shape: f32[8,128], index: 6, kind: output, shape index: {4}]
  %7 = xla_tuple %s2, %s3, %s4, %s5, %s6
  %s8 = sld [smem:[#allocation0]]
  $region66: #{tpu_custom_call.1} parent=0
    _
  %s10 = ssub.s32 1, %s8
  %s11 = scalar_select 0, %s10, %s8
  $region1: #{tpu_custom_call.1} parent=0
    #allocation7 [shape = 'u8[8192]{0}', space=vmem, size = 0x2000, scoped, tag = 'input window, operand 0, single buffered']
    #allocation8 [shape = 's32[1]{0}', space=sflag, size = 0x4, scoped, tag = 'scoped memory for tpu_custom_call.1']
    #allocation9 [shape = 's32[1]{0}', space=sflag, size = 0x4, scoped, tag = 'scoped memory for tpu_custom_call.1']
    #allocation10 [shape = 'u8[8192]{0}', space=vmem, size = 0x2000, scoped, tag = 'input window, operand 1, single buffered']
    #allocation11 [shape = 's32[1]{0}', space=sflag, size = 0x4, scoped, tag = 'scoped memory for tpu_custom_call.1']
    #allocation12 [shape = 'u8[4096]{0}', space=vmem, size = 0x1000, scoped, tag = 'output window, operand 0, single buffered']
    #allocation13 [shape = 'u8[4096]{0}', space=vmem, size = 0x1000, scoped, tag = 'output window, operand 1, single buffered']
    #allocation14 [shape = 's32[1]{0}', space=sflag, size = 0x4, scoped, tag = 'scoped memory for tpu_custom_call.1']
    #allocation15 [shape = 'u8[4096]{0}', space=vmem, size = 0x1000, scoped, tag = 'output window, operand 2, single buffered']
    #allocation16 [shape = 'u8[4096]{0}', space=vmem, size = 0x1000, scoped, tag = 'output window, operand 3, single buffered']
    #allocation17 [shape = 's32[1]{0}', space=sflag, size = 0x4, scoped, tag = 'scoped memory for tpu_custom_call.1']
    #allocation18 [shape = 'u8[4096]{0}', space=vmem, size = 0x1000, scoped, tag = 'output window, operand 4, single buffered']
    %12 = vsyncpa [#allocation8], 0
    %13 = vsyncpa [#allocation11], 0
    %14 = vsyncpa [#allocation9], 0
    %15 = vsyncpa [#allocation14], 0
    %16 = vsyncpa [#allocation17], 0
    // Predicated region
    $region2: #{tpu_custom_call.1} parent=1 // pred_check
      _
    $region3: #{tpu_custom_call.1} parent=1 // pred_check_branch
      %18 = sbr.rel (0) target = $region5
    $region4: #{tpu_custom_call.1} parent=1 // pred_region
      %s20 = ssub.s32 256, 256
      %21 = vsyncadd [#allocation8], %s20
      %s22 = sshll.u32 [#allocation7], 4
      %s23 = int_to_ptr.vmem [resolvable:$true] %s22
      %28 = dma.hbm_to_vmem [thread:$0]  %s0, 256, %s23, [#allocation8], 128, 128, 8
    $region5: #{tpu_custom_call.1} parent=1 // pred_fallthru
      _
    // Predicated region
    $region6: #{tpu_custom_call.1} parent=1 // pred_check
      _
    $region7: #{tpu_custom_call.1} parent=1 // pred_check_branch
      %30 = sbr.rel (0) target = $region9
    $region8: #{tpu_custom_call.1} parent=1 // pred_region
      %s32 = ssub.s32 256, 256
      %33 = vsyncadd [#allocation11], %s32
      %s34 = sshll.u32 [#allocation10], 4
      %s35 = int_to_ptr.vmem [resolvable:$true] %s34
      %40 = dma.hbm_to_vmem [thread:$0]  %s1, 256, %s35, [#allocation11], 128, 128, 8
    $region9: #{tpu_custom_call.1} parent=1 // pred_fallthru
      _
    // Predicated region
    $region10: #{tpu_custom_call.1} parent=1 // pred_check
      _
    $region11: #{tpu_custom_call.1} parent=1 // pred_check_branch
      %42 = sbr.rel (0) target = $region13
    $region12: #{tpu_custom_call.1} parent=1 // pred_region
      %43 = dma.done [#allocation8], 256
    $region13: #{tpu_custom_call.1} parent=1 // pred_fallthru
      _
    // Predicated region
    $region14: #{tpu_custom_call.1} parent=1 // pred_check
      _
    $region15: #{tpu_custom_call.1} parent=1 // pred_check_branch
      %45 = sbr.rel (0) target = $region17
    $region16: #{tpu_custom_call.1} parent=1 // pred_region
      %46 = dma.done [#allocation11], 256
    $region17: #{tpu_custom_call.1} parent=1 // pred_fallthru
      _
    %p47 = scmp.eq.s32.totalorder 0, 0
    // Predicated region
    $region18: #{tpu_custom_call.1} parent=1 // pred_check
      %p48 = pneg %p47
    $region19: #{tpu_custom_call.1} parent=1 // pred_check_branch
      %50 = sbr.rel (%p48) target = $region21
    $region20: #{tpu_custom_call.1} parent=1 // pred_region
      %51 = vst [vmem:[#allocation2] sm:$0xff] 0.0
      %52 = vst [vmem:[#allocation3] sm:$0xff] 0.0
      %53 = vst [vmem:[#allocation4] sm:$0xff] 0.0
      %54 = vst [vmem:[#allocation5] sm:$0xff] 0.0
      %55 = vst [vmem:[#allocation6] sm:$0xff] 0.0
    $region21: #{tpu_custom_call.1} parent=1 // pred_fallthru
      _
    %v56 = vld [vmem:[#allocation7] sm:$0xff]
    %v57 = vld [vmem:[#allocation7 + $0x8] sm:$0xff]
    %v58 = vld [vmem:[#allocation10] sm:$0xff]
    %v59 = vld [vmem:[#allocation10 + $0x8] sm:$0xff]
    %v60 = vxor.u32 %v56, 2147483648
    %v61 = vxor.u32 %v57, 2147483648
    %v62 = vmul.f32 %v60, 1.442695
    %v63 = vpow.pop %v62
    %v64 = vmul.f32 %v61, 1.442695
    %v65 = vpow.pop %v64
    %v66 = vadd.f32 %v63, 1.0
    %v67 = vadd.f32 %v65, 1.0
    %v68 = vrcp.pop %v66
    %v69 = vmul.f32 1.0, %v68
    %v70 = vrcp.pop %v67
    %v71 = vmul.f32 1.0, %v70
    %vm72 = vcmp.ne.f32.partialorder %v58, 255.0
    %vm73 = vcmp.ne.f32.partialorder %v59, 255.0
    %v74 = vld [vmem:[#allocation2] sm:$0xff]
    %v75 = vmul.f32 %v69, %v58
    %v76 = vmul.f32 %v71, %v59
    %v77 = vadd.f32 %v75, %v76
    %v78 = vadd.f32 %v74, %v77
    %79 = vst [vmem:[#allocation2] sm:$0xff] %v78
    %v80 = vld [vmem:[#allocation3] sm:$0xff]
    %v81 = vadd.f32 %v69, %v71
    %v82 = vadd.f32 %v80, %v81
    %83 = vst [vmem:[#allocation3] sm:$0xff] %v82
    %v84 = vld [vmem:[#allocation4] sm:$0xff]
    %v85 = vadd.f32 %v58, %v59
    %v86 = vadd.f32 %v84, %v85
    %87 = vst [vmem:[#allocation4] sm:$0xff] %v86
    %v88 = vmax.f32 %v69, 1e-06
    %v89 = vmax.f32 %v71, 1e-06
    %v90 = vmin.f32 %v88, 0.999999
    %v91 = vmin.f32 %v89, 0.999999
    %v92 = vmax.f32 %v58, 1e-06
    %v93 = vmax.f32 %v59, 1e-06
    %v94 = vmin.f32 %v92, 0.999999
    %v95 = vmin.f32 %v93, 0.999999
    %v96 = vsub.f32 1.0, %v94
    %v97 = vsub.f32 1.0, %v95
    %v98 = vsub.f32 1.0, %v90
    %v99 = vsub.f32 1.0, %v91
    %v100 = vmul.f32 %v96, %v98
    %v101 = vmul.f32 %v97, %v99
    %v102 = vmul.f32 %v94, %v90
    %v103 = vmul.f32 %v95, %v91
    %v104 = vadd.f32 %v100, %v102
    %v105 = vadd.f32 %v101, %v103
    %v106 = vsub.f32 1.0, %v104
    %v107 = vsub.f32 1.0, %v105
    %v108 = vmul.f32 %v106, %v106
    %v109 = vmul.f32 %v107, %v107
    %v110 = vsub.f32 0.0, %v108
    %v111 = vsub.f32 0.0, %v109
    %v112 = vlog2.pop %v104
    %v113 = vmul.f32 %v112, 0.6931472
    %v114 = vlog2.pop %v105
    %v115 = vmul.f32 %v114, 0.6931472
    %v116 = vmul.f32 %v110, %v113
    %v117 = vmul.f32 %v111, %v115
    %v118 = vld [vmem:[#allocation5] sm:$0xff]
    %v119 = vsel %vm72, %v116, 0.0
    %v120 = vsel %vm73, %v117, 0.0
    %v121 = vadd.f32 %v119, %v120
    %v122 = vadd.f32 %v118, %v121
    %123 = vst [vmem:[#allocation5] sm:$0xff] %v122
    %v124 = vld [vmem:[#allocation6] sm:$0xff]
    %v125 = vsel %vm72, 1.0, 0.0
    %v126 = vsel %vm73, 1.0, 0.0
    %v127 = vadd.f32 %v125, %v126
    %v128 = vadd.f32 %v124, %v127
    %129 = vst [vmem:[#allocation6] sm:$0xff] %v128
    // Predicated region
    $region22: #{tpu_custom_call.1} parent=1 // pred_check
      %p130 = pneg %p47
    $region23: #{tpu_custom_call.1} parent=1 // pred_check_branch
      %132 = sbr.rel (%p130) target = $region25
    $region24: #{tpu_custom_call.1} parent=1 // pred_region
      %v133 = vld [vmem:[#allocation2] sm:$0xff]
      %134 = vst [vmem:[#allocation12] sm:$0xff] %v133
      %v135 = vld [vmem:[#allocation3] sm:$0xff]
      %136 = vst [vmem:[#allocation13] sm:$0xff] %v135
      %v137 = vld [vmem:[#allocation4] sm:$0xff]
      %138 = vst [vmem:[#allocation15] sm:$0xff] %v137
      %v139 = vld [vmem:[#allocation5] sm:$0xff]
      %140 = vst [vmem:[#allocation16] sm:$0xff] %v139
      %v141 = vld [vmem:[#allocation6] sm:$0xff]
      %142 = vst [vmem:[#allocation18] sm:$0xff] %v141
    $region25: #{tpu_custom_call.1} parent=1 // pred_fallthru
      _
    // Predicated region
    $region26: #{tpu_custom_call.1} parent=1 // pred_check
      _
    $region27: #{tpu_custom_call.1} parent=1 // pred_check_branch
      %144 = sbr.rel (0) target = $region29
    $region28: #{tpu_custom_call.1} parent=1 // pred_region
      %s146 = ssub.s32 128, 128
      %147 = vsyncadd [#allocation9], %s146
      %s149 = sshll.u32 [#allocation12], 4
      %s150 = int_to_ptr.vmem [resolvable:$true] %s149
      %152 = dma.vmem_to_hbm [thread:$0]  %s150, 128, %s2, [#allocation9]
    $region29: #{tpu_custom_call.1} parent=1 // pred_fallthru
      _
    // Predicated region
    $region30: #{tpu_custom_call.1} parent=1 // pred_check
      _
    $region31: #{tpu_custom_call.1} parent=1 // pred_check_branch
      %154 = sbr.rel (0) target = $region33
    $region32: #{tpu_custom_call.1} parent=1 // pred_region
      %s156 = ssub.s32 128, 128
      %157 = vsyncadd [#allocation14], %s156
      %s159 = sshll.u32 [#allocation13], 4
      %s160 = int_to_ptr.vmem [resolvable:$true] %s159
      %162 = dma.vmem_to_hbm [thread:$0]  %s160, 128, %s3, [#allocation14]
    $region33: #{tpu_custom_call.1} parent=1 // pred_fallthru
      _
    // Predicated region
    $region34: #{tpu_custom_call.1} parent=1 // pred_check
      _
    $region35: #{tpu_custom_call.1} parent=1 // pred_check_branch
      %164 = sbr.rel (0) target = $region37
    $region36: #{tpu_custom_call.1} parent=1 // pred_region
      %s166 = ssub.s32 128, 128
      %167 = vsyncadd [#allocation14], %s166
      %s169 = sshll.u32 [#allocation15], 4
      %s170 = int_to_ptr.vmem [resolvable:$true] %s169
      %172 = dma.vmem_to_hbm [thread:$0]  %s170, 128, %s4, [#allocation14]
    $region37: #{tpu_custom_call.1} parent=1 // pred_fallthru
      _
    // Predicated region
    $region38: #{tpu_custom_call.1} parent=1 // pred_check
      _
    $region39: #{tpu_custom_call.1} parent=1 // pred_check_branch
      %174 = sbr.rel (0) target = $region41
    $region40: #{tpu_custom_call.1} parent=1 // pred_region
      %s176 = ssub.s32 128, 128
      %177 = vsyncadd [#allocation17], %s176
      %s179 = sshll.u32 [#allocation16], 4
      %s180 = int_to_ptr.vmem [resolvable:$true] %s179
      %182 = dma.vmem_to_hbm [thread:$0]  %s180, 128, %s5, [#allocation17]
    $region41: #{tpu_custom_call.1} parent=1 // pred_fallthru
      _
    // Predicated region
    $region42: #{tpu_custom_call.1} parent=1 // pred_check
      _
    $region43: #{tpu_custom_call.1} parent=1 // pred_check_branch
      %184 = sbr.rel (0) target = $region45
    $region44: #{tpu_custom_call.1} parent=1 // pred_region
      %s186 = ssub.s32 128, 128
      %187 = vsyncadd [#allocation17], %s186
      %s189 = sshll.u32 [#allocation18], 4
      %s190 = int_to_ptr.vmem [resolvable:$true] %s189
      %192 = dma.vmem_to_hbm [thread:$0]  %s190, 128, %s6, [#allocation17]
    $region45: #{tpu_custom_call.1} parent=1 // pred_fallthru
      _
    // Predicated region
    $region46: #{tpu_custom_call.1} parent=1 // pred_check
      _
    $region47: #{tpu_custom_call.1} parent=1 // pred_check_branch
      %194 = sbr.rel (0) target = $region49
    $region48: #{tpu_custom_call.1} parent=1 // pred_region
      %195 = dma.done [#allocation9], 128
    $region49: #{tpu_custom_call.1} parent=1 // pred_fallthru
      _
    // Predicated region
    $region50: #{tpu_custom_call.1} parent=1 // pred_check
      _
    $region51: #{tpu_custom_call.1} parent=1 // pred_check_branch
      %197 = sbr.rel (0) target = $region53
    $region52: #{tpu_custom_call.1} parent=1 // pred_region
      %198 = dma.done [#allocation14], 128
    $region53: #{tpu_custom_call.1} parent=1 // pred_fallthru
      _
    // Predicated region
    $region54: #{tpu_custom_call.1} parent=1 // pred_check
      _
    $region55: #{tpu_custom_call.1} parent=1 // pred_check_branch
      %200 = sbr.rel (0) target = $region57
    $region56: #{tpu_custom_call.1} parent=1 // pred_region
      %201 = dma.done [#allocation14], 128
    $region57: #{tpu_custom_call.1} parent=1 // pred_fallthru
      _
    // Predicated region
    $region58: #{tpu_custom_call.1} parent=1 // pred_check
      _
    $region59: #{tpu_custom_call.1} parent=1 // pred_check_branch
      %203 = sbr.rel (0) target = $region61
    $region60: #{tpu_custom_call.1} parent=1 // pred_region
      %204 = dma.done [#allocation17], 128
    $region61: #{tpu_custom_call.1} parent=1 // pred_fallthru
      _
    // Predicated region
    $region62: #{tpu_custom_call.1} parent=1 // pred_check
      _
    $region63: #{tpu_custom_call.1} parent=1 // pred_check_branch
      %206 = sbr.rel (0) target = $region65
    $region64: #{tpu_custom_call.1} parent=1 // pred_region
      %207 = dma.done [#allocation17], 128
    $region65: #{tpu_custom_call.1} parent=1 // pred_fallthru
      _
    %208 = vsyncpa [#allocation8], 1
    %209 = vsyncpa [#allocation11], 1
    %210 = vsyncpa [#allocation9], 1
    %211 = vsyncpa [#allocation14], 1
    %212 = vsyncpa [#allocation17], 1

</llo_original>
